<compile_context>
chip_gen: v7x
topology: tpu7x:2x2x1
jax: 0.10.0
libtpu: 0.0.40
codegen_flags: <defaults>
</compile_context>

<pallas_src>
import functools

import jax
import jax.numpy as jnp
from jax.experimental import pallas as pl
from jax.experimental.pallas import tpu as pltpu

_INV_SQRT2 = 0.7071067811865476
_MiB = 1024 * 1024


def _ffn_kernel(x_ref, w1_ref, b1_ref, w2_ref, b2_ref, o_ref, acc_ref,
                *, mxu_dtype, approximate_gelu):
    # x_ref: (tile_m, dim)      w1_ref: (dim, tile_h)   b1_ref: (1, tile_h) f32
    # w2_ref: (tile_h, dim)     b2_ref: (1, dim) f32
    # o_ref: (tile_m, dim)      acc_ref: (tile_m, dim) f32 scratch
    h_idx = pl.program_id(1)

    @pl.when(h_idx == 0)
    def _():
        acc_ref[...] = jnp.zeros_like(acc_ref)

    # Cast activations to the MXU operand dtype inside the kernel (VPU work
    # hidden under MXU slack) instead of a separate XLA pass in the wrapper.
    x = x_ref[...].astype(mxu_dtype)

    # First linear on this hidden slice (MXU, f32 accumulation).
    h = jnp.dot(x, w1_ref[...], preferred_element_type=jnp.float32)
    h = h + b1_ref[...]                      # (1, tile_h) f32 row broadcast

    # GELU in f32. Default is the exact erf form (torch nn.GELU() default);
    # the tanh approximation lowers to the EUP and is ~free under MXU work.
    if approximate_gelu:
        h = jax.nn.gelu(h, approximate=True)
    else:
        h = 0.5 * h * (1.0 + jax.lax.erf(h * _INV_SQRT2))

    # Dropout(p=0.0) is the identity in train and eval -> no-op.

    # Second linear: accumulate this hidden slice's contribution in f32.
    acc_ref[...] += jnp.dot(h.astype(mxu_dtype), w2_ref[...],
                            preferred_element_type=jnp.float32)

    @pl.when(h_idx == pl.num_programs(1) - 1)
    def _():
        o_ref[...] = (acc_ref[...] + b2_ref[...]).astype(o_ref.dtype)


def _round_up(x, m):
    return ((x + m - 1) // m) * m


def _divisor_tile(total, requested, align):
    """Largest align-multiple <= requested that divides total.
    Returns `total` itself when total <= requested (full-extent block),
    and 0 when no aligned divisor exists."""
    if total <= requested:
        return total
    t = (requested // align) * align
    while t >= align:
        if total % t == 0:
            return t
        t -= align
    return 0


def _vmem_budget_bytes():
    try:
        cap = pltpu.get_tpu_info().vmem_capacity_bytes
    except Exception:
        cap = 64 * _MiB            # conservative: v7x physical per-TC VMEM
    return int(cap) * 3 // 4       # leave headroom for Mosaic internals


def feed_forward(x, w1, b1, w2, b2, *, tile_m=256, tile_h=512,
                 mxu_dtype=jnp.bfloat16, out_dtype=None,
                 approximate_gelu=False):
    """Fused Linear -> GELU -> Dropout(0) -> Linear -> Dropout(0).

    x: (B, S, dim); w1: (dim, hidden); b1: (hidden,); w2: (hidden, dim);
    b2: (dim,). Returns (B, S, dim) in `out_dtype` (default: x.dtype).

    mxu_dtype: MXU operand dtype. bf16 by default (native MXU rate on
      v5e/v6e/v7x; f32 accumulation and f32 bias/GELU math). Pass jnp.float32
      for exact nn.Linear numerics. Pass the weights already in `mxu_dtype`
      (cached by the caller) to avoid a per-call cast pass over them.
    """
    B, S, dim = x.shape
    hidden = w1.shape[1]
    M = B * S
    out_dtype = x.dtype if out_dtype is None else out_dtype

    x2d = x.reshape(M, dim)          # activations stay in their dtype; cast in-kernel

    # Weights should be cached in mxu_dtype by the caller; this cast is only a
    # convenience fallback (it costs an extra HBM pass over the weights).
    if w1.dtype != mxu_dtype:
        w1 = w1.astype(mxu_dtype)
    if w2.dtype != mxu_dtype:
        w2 = w2.astype(mxu_dtype)

    # Bias math stays f32 (cheap VPU adds; avoids bf16 elementwise on v5e).
    b1_2d = b1.reshape(1, hidden).astype(jnp.float32)
    b2_2d = b2.reshape(1, dim).astype(jnp.float32)

    x_isz = jnp.dtype(x2d.dtype).itemsize
    w_isz = jnp.dtype(mxu_dtype).itemsize
    o_isz = jnp.dtype(out_dtype).itemsize

    # ---- tile selection under a per-generation VMEM budget -----------------
    budget = _vmem_budget_bytes()

    def vmem_need(tm, th):
        return (2 * tm * dim * x_isz                  # x tiles (double buffered)
                + 2 * tm * dim * o_isz                # out tiles (double buffered)
                + 2 * (dim * th + th * dim) * w_isz   # streamed w1 / w2 tiles
                + 2 * (th + dim) * 4                  # biases
                + tm * dim * 4                        # f32 accumulator scratch
                + tm * th * 4)                        # f32 hidden intermediate

    tm_req = min(tile_m, _round_up(M, 8))
    th_req = min(tile_h, hidden)
    while vmem_need(tm_req, th_req) > budget and (tm_req > 128 or th_req > 256):
        if th_req >= tm_req and th_req > 256:
            th_req //= 2
        elif tm_req > 128:
            tm_req //= 2
        else:
            break

    # Sublane alignment for the M-tiled (x / out) blocks.
    m_align = 8 if min(x_isz, o_isz) >= 4 else 16
    tile_m = _divisor_tile(M, tm_req, m_align)
    m_pad = M
    if tile_m == 0:
        # No aligned divisor of M: pad the tail.
        # TODO(synk): mask the last tile's store in-kernel instead of
        # materializing a padded copy of x in HBM.
        tile_m = max(m_align, (tm_req // m_align) * m_align)
        m_pad = _round_up(M, tile_m)
        x2d = jnp.pad(x2d, ((0, m_pad - M), (0, 0)))

    # Hidden tile: lane dim of the w1 slice / sublane dim of the w2 slice.
    tile_h = _divisor_tile(hidden, th_req, 128)
    if tile_h == 0:
        tile_h = hidden              # single hidden slice (small hidden dims)

    grid = (m_pad // tile_m, hidden // tile_h)

    cost = pl.CostEstimate(
        flops=4 * m_pad * dim * hidden,               # two (M, dim, hidden) matmuls
        transcendentals=m_pad * hidden,               # one erf/tanh per hidden unit
        bytes_accessed=(m_pad * dim * x_isz
                        + 2 * dim * hidden * w_isz
                        + (hidden + dim) * 4
                        + m_pad * dim * o_isz),
    )

    kernel = functools.partial(_ffn_kernel, mxu_dtype=mxu_dtype,
                               approximate_gelu=approximate_gelu)

    # NOTE: w1/w2/b1 stream over the hidden grid axis, so default
    # double-buffering is what hides their DMA; only b2 has a constant index
    # map and it is tiny, so no pl.Buffered(1) override is needed anymore.
    # TODO(synk): on v7x consider fp8 weight operands (MXU-native) and
    # pltpu.CORE_PARALLEL on the M axis if xprof shows one TensorCore idle.
    out2d = pl.pallas_call(
        kernel,
        out_shape=jax.ShapeDtypeStruct((m_pad, dim), out_dtype),
        grid_spec=pltpu.PrefetchScalarGridSpec(
            num_scalar_prefetch=0,
            grid=grid,
            in_specs=[
                pl.BlockSpec((tile_m, dim), lambda m, h: (m, 0)),     # x tile
                pl.BlockSpec((dim, tile_h), lambda m, h: (0, h)),     # w1 slice
                pl.BlockSpec((1, tile_h), lambda m, h: (0, h)),       # b1 slice
                pl.BlockSpec((tile_h, dim), lambda m, h: (h, 0)),     # w2 slice
                pl.BlockSpec((1, dim), lambda m, h: (0, 0)),          # b2
            ],
            out_specs=pl.BlockSpec((tile_m, dim), lambda m, h: (m, 0)),
            scratch_shapes=[pltpu.VMEM((tile_m, dim), jnp.float32)],
        ),
        compiler_params=pltpu.CompilerParams(
            dimension_semantics=("parallel", "arbitrary"),
            vmem_limit_bytes=int(max(32 * _MiB,
                                     min(budget, 2 * vmem_need(tile_m, tile_h)))),
        ),
        cost_estimate=cost,
    )(x2d, w1, b1_2d, w2, b2_2d)

    return out2d[:M].reshape(B, S, dim)


def _reference(x, w1, b1, w2, b2):
    hp = jax.lax.Precision.HIGHEST
    h = jnp.dot(x, w1, precision=hp) + b1
    h = jax.nn.gelu(h, approximate=False)
    return jnp.dot(h, w2, precision=hp) + b2


if __name__ == "__main__":
    # Small shapes consistent with the module: tokens of dim=32, hidden=64.
    B, S, dim, hidden = 2, 8, 32, 64

    key = jax.random.PRNGKey(0)
    kx, kw1, kb1, kw2, kb2 = jax.random.split(key, 5)

    x = jax.random.normal(kx, (B, S, dim), dtype=jnp.float32)

    # Deterministic init mirroring nn.Linear's uniform(-1/sqrt(fan_in), +...).
    lim1 = 1.0 / jnp.sqrt(dim)
    lim2 = 1.0 / jnp.sqrt(hidden)
    w1 = jax.random.uniform(kw1, (dim, hidden), jnp.float32, -lim1, lim1)
    b1 = jax.random.uniform(kb1, (hidden,), jnp.float32, -lim1, lim1)
    w2 = jax.random.uniform(kw2, (hidden, dim), jnp.float32, -lim2, lim2)
    b2 = jax.random.uniform(kb2, (dim,), jnp.float32, -lim2, lim2)

    ref = _reference(x, w1, b1, w2, b2)

    # Default path: bf16 MXU operands (weights pre-cast once, as a caller
    # caching them would), f32 accumulation, f32 output.
    w1_bf16 = w1.astype(jnp.bfloat16)
    w2_bf16 = w2.astype(jnp.bfloat16)
    out_bf16 = feed_forward(x, w1_bf16, b1, w2_bf16, b2, tile_m=8)
    out_bf16 = jax.block_until_ready(out_bf16)
    assert out_bf16.shape == (B, S, dim)
    assert out_bf16.dtype == x.dtype
    assert jnp.allclose(out_bf16, ref, atol=5e-2, rtol=5e-2), \
        "bf16-MXU path mismatch vs reference"

    # Exact-numerics path: f32 MXU operands, tight match to nn.Linear/nn.GELU.
    out_f32 = feed_forward(x, w1, b1, w2, b2, tile_m=8, mxu_dtype=jnp.float32)
    out_f32 = jax.block_until_ready(out_f32)
    assert out_f32.shape == (B, S, dim)
    assert jnp.allclose(out_f32, ref, atol=1e-4, rtol=1e-4), \
        "f32 path mismatch vs reference"

    print("KERNEL_OK")
</pallas_src>

<mosaic_0001>
module attributes {stable_mosaic.version = 11 : i64} {
  func.func @_ffn_kernel(%arg0: i32, %arg1: i32, %arg2: memref<8x32xf32, #tpu.memory_space<vmem>>, %arg3: memref<32x64xbf16, #tpu.memory_space<vmem>>, %arg4: memref<1x64xf32, #tpu.memory_space<vmem>>, %arg5: memref<64x32xbf16, #tpu.memory_space<vmem>>, %arg6: memref<1x32xf32, #tpu.memory_space<vmem>>, %arg7: memref<8x32xf32, #tpu.memory_space<vmem>>, %arg8: memref<8x32xf32, #tpu.memory_space<vmem>>) attributes {dimension_semantics = [#tpu.dimension_semantics<parallel>, #tpu.dimension_semantics<arbitrary>], iteration_bounds = array<i64: 2, 1>, scalar_prefetch = 0 : i64, scratch_operands = 1 : i64, tpu.core_type = #tpu.core_type<tc>, window_params = [{transform_indices = @transform_0, window_bounds = array<i64: 8, 32>}, {transform_indices = @transform_1, window_bounds = array<i64: 32, 64>}, {transform_indices = @transform_2, window_bounds = array<i64: 1, 64>}, {transform_indices = @transform_3, window_bounds = array<i64: 64, 32>}, {pipeline_mode = #tpu.pipeline_mode<synchronous>, transform_indices = @transform_4, window_bounds = array<i64: 1, 32>}, {transform_indices = @transform_5, window_bounds = array<i64: 8, 32>}]} {
    %c0_i32 = arith.constant 0 : i32
    %0 = arith.cmpi eq, %arg1, %c0_i32 : i32
    %1 = arith.extui %0 : i1 to i32
    %c0_i32_0 = arith.constant 0 : i32
    %2 = arith.cmpi ne, %1, %c0_i32_0 : i32
    scf.if %2 {
      %cst_18 = arith.constant 0.000000e+00 : f32
      %27 = vector.broadcast %cst_18 : f32 to vector<8x32xf32>
      %c0_19 = arith.constant 0 : index
      %c0_20 = arith.constant 0 : index
      %28 = vector.load %arg8[%c0_19, %c0_20] : memref<8x32xf32, #tpu.memory_space<vmem>>, vector<8x32xf32>
      tpu.vector_store %arg8[%c0_19, %c0_20], %27 {strides = array<i32>} : memref<8x32xf32, #tpu.memory_space<vmem>>, vector<8x32xf32>,
    } else {
    }
    %c0 = arith.constant 0 : index
    %c0_1 = arith.constant 0 : index
    %3 = vector.load %arg2[%c0, %c0_1] : memref<8x32xf32, #tpu.memory_space<vmem>>, vector<8x32xf32>
    %4 = arith.truncf %3 : vector<8x32xf32> to vector<8x32xbf16>
    %c0_2 = arith.constant 0 : index
    %c0_3 = arith.constant 0 : index
    %5 = vector.load %arg3[%c0_2, %c0_3] : memref<32x64xbf16, #tpu.memory_space<vmem>>, vector<32x64xbf16>
    %cst = arith.constant dense<0.000000e+00> : vector<8x64xf32>
    %6 = tpu.matmul %4, %5, %cst {dimension_numbers = #tpu.dot_dimension_numbers<[1], [0], [0], [1], [0, 0, 1, 1], [], []>} : vector<8x32xbf16>, vector<32x64xbf16>, vector<8x64xf32> -> vector<8x64xf32>
    %c0_4 = arith.constant 0 : index
    %c0_5 = arith.constant 0 : index
    %7 = vector.load %arg4[%c0_4, %c0_5] : memref<1x64xf32, #tpu.memory_space<vmem>>, vector<1x64xf32>
    %8 = vector.broadcast %7 : vector<1x64xf32> to vector<8x64xf32>
    %9 = arith.addf %6, %8 : vector<8x64xf32>
    %cst_6 = arith.constant 5.000000e-01 : f32
    %10 = vector.broadcast %cst_6 : f32 to vector<8x64xf32>
    %11 = arith.mulf %10, %9 : vector<8x64xf32>
    %cst_7 = arith.constant 0.707106769 : f32
    %12 = vector.broadcast %cst_7 : f32 to vector<8x64xf32>
    %13 = arith.mulf %9, %12 : vector<8x64xf32>
    %14 = math.erf %13 : vector<8x64xf32>
    %cst_8 = arith.constant 1.000000e+00 : f32
    %15 = vector.broadcast %cst_8 : f32 to vector<8x64xf32>
    %16 = arith.addf %15, %14 : vector<8x64xf32>
    %17 = arith.mulf %11, %16 : vector<8x64xf32>
    %c0_9 = arith.constant 0 : index
    %c0_10 = arith.constant 0 : index
    %18 = vector.load %arg8[%c0_9, %c0_10] : memref<8x32xf32, #tpu.memory_space<vmem>>, vector<8x32xf32>
    %19 = arith.truncf %17 : vector<8x64xf32> to vector<8x64xbf16>
    %c0_11 = arith.constant 0 : index
    %c0_12 = arith.constant 0 : index
    %20 = vector.load %arg5[%c0_11, %c0_12] : memref<64x32xbf16, #tpu.memory_space<vmem>>, vector<64x32xbf16>
    %cst_13 = arith.constant dense<0.000000e+00> : vector<8x32xf32>
    %21 = tpu.matmul %19, %20, %cst_13 {dimension_numbers = #tpu.dot_dimension_numbers<[1], [0], [0], [1], [0, 0, 1, 1], [], []>} : vector<8x64xbf16>, vector<64x32xbf16>, vector<8x32xf32> -> vector<8x32xf32>
    %22 = arith.addf %18, %21 : vector<8x32xf32>
    %c0_14 = arith.constant 0 : index
    %c0_15 = arith.constant 0 : index
    %23 = vector.load %arg8[%c0_14, %c0_15] : memref<8x32xf32, #tpu.memory_space<vmem>>, vector<8x32xf32>
    tpu.vector_store %arg8[%c0_14, %c0_15], %22 {strides = array<i32>} : memref<8x32xf32, #tpu.memory_space<vmem>>, vector<8x32xf32>,
    %c0_i32_16 = arith.constant 0 : i32
    %24 = arith.cmpi eq, %arg1, %c0_i32_16 : i32
    %25 = arith.extui %24 : i1 to i32
    %c0_i32_17 = arith.constant 0 : i32
    %26 = arith.cmpi ne, %25, %c0_i32_17 : i32
    scf.if %26 {
      %c0_18 = arith.constant 0 : index
      %c0_19 = arith.constant 0 : index
      %27 = vector.load %arg8[%c0_18, %c0_19] : memref<8x32xf32, #tpu.memory_space<vmem>>, vector<8x32xf32>
      %c0_20 = arith.constant 0 : index
      %c0_21 = arith.constant 0 : index
      %28 = vector.load %arg6[%c0_20, %c0_21] : memref<1x32xf32, #tpu.memory_space<vmem>>, vector<1x32xf32>
      %29 = vector.broadcast %28 : vector<1x32xf32> to vector<8x32xf32>
      %30 = arith.addf %27, %29 : vector<8x32xf32>
      %c0_22 = arith.constant 0 : index
      %c0_23 = arith.constant 0 : index
      %31 = vector.load %arg7[%c0_22, %c0_23] : memref<8x32xf32, #tpu.memory_space<vmem>>, vector<8x32xf32>
      tpu.vector_store %arg7[%c0_22, %c0_23], %30 {strides = array<i32>} : memref<8x32xf32, #tpu.memory_space<vmem>>, vector<8x32xf32>,
    } else {
    }
    return
  }
  func.func @transform_0(%arg0: i32, %arg1: i32) -> (i32, i32) {
    %c0_i32 = arith.constant 0 : i32
    %c0_i32_0 = arith.constant 0 : i32
    return %arg0, %c0_i32 : i32, i32
  }
  func.func @transform_1(%arg0: i32, %arg1: i32) -> (i32, i32) {
    %c0_i32 = arith.constant 0 : i32
    %c0_i32_0 = arith.constant 0 : i32
    return %c0_i32, %arg1 : i32, i32
  }
  func.func @transform_2(%arg0: i32, %arg1: i32) -> (i32, i32) {
    %c0_i32 = arith.constant 0 : i32
    %c0_i32_0 = arith.constant 0 : i32
    return %c0_i32, %arg1 : i32, i32
  }
  func.func @transform_3(%arg0: i32, %arg1: i32) -> (i32, i32) {
    %c0_i32 = arith.constant 0 : i32
    %c0_i32_0 = arith.constant 0 : i32
    return %arg1, %c0_i32 : i32, i32
  }
  func.func @transform_4(%arg0: i32, %arg1: i32) -> (i32, i32) {
    %c0_i32 = arith.constant 0 : i32
    %c0_i32_0 = arith.constant 0 : i32
    %c0_i32_1 = arith.constant 0 : i32
    return %c0_i32, %c0_i32_0 : i32, i32
  }
  func.func @transform_5(%arg0: i32, %arg1: i32) -> (i32, i32) {
    %c0_i32 = arith.constant 0 : i32
    %c0_i32_0 = arith.constant 0 : i32
    return %arg0, %c0_i32 : i32, i32
  }
}

</mosaic_0001>

<llo_original>
// kernel: tpu_custom_call.1
$region0: #{tpu_custom_call.1}
  #allocation0 [shape = 'u32[]', space=smem, size = 0x4, offset = 0x4, fixed_abs, tag = 'smem constant byte address 0x4 - core index']
  #allocation1 [shape = 'u32[144,128]{1,0:T(1,128)}', space=vmem, size = 0x12000, scoped, tag = 'internal scratch']
  #allocation2 [shape = 'f32[8,32]{1,0:T(8,128)}', space=vmem, size = 0x1000, scoped, tag = 'scratch operand']
  %s0 = inlined_call_operand.vmem [shape: f32[16,32], index: 0, kind: input, shape index: {}]
  %s1 = inlined_call_operand.vmem [shape: bf16[32,64], index: 1, kind: input, shape index: {}]
  %s2 = inlined_call_operand.vmem [shape: f32[1,64], index: 2, kind: input, shape index: {}]
  %s3 = inlined_call_operand.vmem [shape: bf16[64,32], index: 3, kind: input, shape index: {}]
  %s4 = inlined_call_operand.vmem [shape: f32[1,32], index: 4, kind: input, shape index: {}]
  %s5 = inlined_call_operand.hbm [shape: f32[16,32], index: 5, kind: output, shape index: {}]
  %s6 = sld [smem:[#allocation0]]
  $region61: #{tpu_custom_call.1} parent=0
    _
  %s8 = ssub.s32 1, %s6
  %s9 = scalar_select 0, %s8, %s6
  $region1: #{tpu_custom_call.1} parent=0
    #allocation3 [shape = 'u8[8192]{0}', space=vmem, size = 0x2000, scoped, tag = 'output window, operand 0']
    #allocation4 [shape = 's32[2]{0}', space=sflag, size = 0x8, scoped, tag = 'scoped memory for tpu_custom_call.1']
    %10 = vsyncpa [#allocation4], 0
    %s11 = scalar_lea.sflag [#allocation4], 1
    %12 = vsyncpa %s11, 0
    loop: start=0, step=1, limit=4
    $region2: #{tpu_custom_call.1} parent=1 // loop_pre_header
      _
    $region3: #{tpu_custom_call.1} parent=1 // loop_header
      %s14 = sphi 0, %s18
      %p15 = scmp.ge.s32.totalorder %s14, 4
      %s21 = sphi 0, %s33
      %s22 = sphi 0, %s29
      %s23 = sphi 0, %s21
      %s24 = sphi 0, %s22
      %s25 = sphi 0, %s23
      %s26 = sphi 0, %s24
      %s36 = sphi 0, %s38
      %s39 = sphi 0, %s36
      %s40 = sphi 0, %s39
      %s56 = sphi 0, %s40
      %s62 = sphi 0, %s64
      %s65 = sphi 0, %s62
      %s66 = sphi 0, %s65
      %s82 = sphi 0, %s66
      %s88 = sphi 0, %s90
      %s91 = sphi 0, %s88
      %s92 = sphi 0, %s91
      %s108 = sphi 0, %s92
      %s114 = sphi 0, %s116
      %s117 = sphi 0, %s114
      %s118 = sphi 0, %s117
      %s134 = sphi 0, %s118
      %s138 = sphi 0, %s138
      %s140 = sphi 0, %s138
      %s141 = sphi 0, %s140
      %s155 = sphi 0, %s141
      %s161 = sphi 0, %s163
      %s164 = sphi 0, %s161
      %s165 = sphi 0, %s164
      %s181 = sphi 0, %s165
    $region4: #{tpu_custom_call.1} parent=1 // loop_header_branch
      %17 = sbr.rel (%p15) target = $region8
    $region5: #{tpu_custom_call.1} parent=1 // loop_body
      %s19 = ssub.s32 %s14, 1
      %s20 = ssub.s32 %s14, 2
      %s27 = sadd.s32 1, %s22
      %p28 = scmp.ge.s32.totalorder %s27, 1
      %s29 = scalar_select %p28, 0, %s27
      %s30 = sadd.s32 1, %s21
      %s31 = scalar_select %p28, %s30, %s21
      %p32 = scmp.ge.s32.totalorder %s31, 2
      %s33 = scalar_select %p32, 0, %s31
      %s34 = ssub.s32 %s21, %s33
      %p35 = scmp.eq.s32.totalorder %s34, 0
      %s37 = sadd.s32 %s36, 1
      %s38 = scalar_select %p35, %s36, %s37
      %p41 = pneg %p35
      %p42 = scmp.eq.s32.totalorder %s14, 1
      %p43 = por %p41, %p42
      %p44 = scmp.ne.s32.totalorder %s36, %s39
      %p45 = scmp.eq.s32.totalorder %s14, 0
      %p46 = por %p44, %p45
      %p47 = scmp.ne.s32.totalorder %s36, %s39
      %p48 = scmp.eq.s32.totalorder %s19, 1
      %p49 = por %p47, %p48
      %p50 = scmp.ne.s32.totalorder %s39, %s40
      %p51 = scmp.eq.s32.totalorder %s19, 0
      %p52 = por %p50, %p51
      %p53 = scmp.ne.s32.totalorder %s39, %s40
      %p54 = scmp.eq.s32.totalorder %s20, 1
      %p55 = por %p53, %p54
      %p57 = scmp.ne.s32.totalorder %s40, %s56
      %p58 = scmp.eq.s32.totalorder %s20, 0
      %p59 = por %p57, %p58
      %s60 = ssub.s32 %s22, %s29
      %p61 = scmp.eq.s32.totalorder %s60, 0
      %s63 = sadd.s32 %s62, 1
      %s64 = scalar_select %p61, %s62, %s63
      %p67 = pneg %p61
      %p68 = scmp.eq.s32.totalorder %s14, 1
      %p69 = por %p67, %p68
      %p70 = scmp.ne.s32.totalorder %s62, %s65
      %p71 = scmp.eq.s32.totalorder %s14, 0
      %p72 = por %p70, %p71
      %p73 = scmp.ne.s32.totalorder %s62, %s65
      %p74 = scmp.eq.s32.totalorder %s19, 1
      %p75 = por %p73, %p74
      %p76 = scmp.ne.s32.totalorder %s65, %s66
      %p77 = scmp.eq.s32.totalorder %s19, 0
      %p78 = por %p76, %p77
      %p79 = scmp.ne.s32.totalorder %s65, %s66
      %p80 = scmp.eq.s32.totalorder %s20, 1
      %p81 = por %p79, %p80
      %p83 = scmp.ne.s32.totalorder %s66, %s82
      %p84 = scmp.eq.s32.totalorder %s20, 0
      %p85 = por %p83, %p84
      %s86 = ssub.s32 %s22, %s29
      %p87 = scmp.eq.s32.totalorder %s86, 0
      %s89 = sadd.s32 %s88, 1
      %s90 = scalar_select %p87, %s88, %s89
      %p93 = pneg %p87
      %p94 = scmp.eq.s32.totalorder %s14, 1
      %p95 = por %p93, %p94
      %p96 = scmp.ne.s32.totalorder %s88, %s91
      %p97 = scmp.eq.s32.totalorder %s14, 0
      %p98 = por %p96, %p97
      %p99 = scmp.ne.s32.totalorder %s88, %s91
      %p100 = scmp.eq.s32.totalorder %s19, 1
      %p101 = por %p99, %p100
      %p102 = scmp.ne.s32.totalorder %s91, %s92
      %p103 = scmp.eq.s32.totalorder %s19, 0
      %p104 = por %p102, %p103
      %p105 = scmp.ne.s32.totalorder %s91, %s92
      %p106 = scmp.eq.s32.totalorder %s20, 1
      %p107 = por %p105, %p106
      %p109 = scmp.ne.s32.totalorder %s92, %s108
      %p110 = scmp.eq.s32.totalorder %s20, 0
      %p111 = por %p109, %p110
      %s112 = ssub.s32 %s22, %s29
      %p113 = scmp.eq.s32.totalorder %s112, 0
      %s115 = sadd.s32 %s114, 1
      %s116 = scalar_select %p113, %s114, %s115
      %p119 = pneg %p113
      %p120 = scmp.eq.s32.totalorder %s14, 1
      %p121 = por %p119, %p120
      %p122 = scmp.ne.s32.totalorder %s114, %s117
      %p123 = scmp.eq.s32.totalorder %s14, 0
      %p124 = por %p122, %p123
      %p125 = scmp.ne.s32.totalorder %s114, %s117
      %p126 = scmp.eq.s32.totalorder %s19, 1
      %p127 = por %p125, %p126
      %p128 = scmp.ne.s32.totalorder %s117, %s118
      %p129 = scmp.eq.s32.totalorder %s19, 0
      %p130 = por %p128, %p129
      %p131 = scmp.ne.s32.totalorder %s117, %s118
      %p132 = scmp.eq.s32.totalorder %s20, 1
      %p133 = por %p131, %p132
      %p135 = scmp.ne.s32.totalorder %s118, %s134
      %p136 = scmp.eq.s32.totalorder %s20, 0
      %p137 = por %p135, %p136
      %s139 = sadd.s32 %s138, 1
      %p142 = scmp.eq.s32.totalorder %s14, 1
      %p143 = scmp.ne.s32.totalorder %s138, %s140
      %p144 = scmp.eq.s32.totalorder %s14, 0
      %p145 = por %p143, %p144
      %p146 = scmp.ne.s32.totalorder %s138, %s140
      %p147 = scmp.eq.s32.totalorder %s19, 1
      %p148 = por %p146, %p147
      %p149 = scmp.ne.s32.totalorder %s140, %s141
      %p150 = scmp.eq.s32.totalorder %s19, 0
      %p151 = por %p149, %p150
      %p152 = scmp.ne.s32.totalorder %s140, %s141
      %p153 = scmp.eq.s32.totalorder %s20, 1
      %p154 = por %p152, %p153
      %p156 = scmp.ne.s32.totalorder %s141, %s155
      %p157 = scmp.eq.s32.totalorder %s20, 0
      %p158 = por %p156, %p157
      %s159 = ssub.s32 %s21, %s33
      %p160 = scmp.eq.s32.totalorder %s159, 0
      %s162 = sadd.s32 %s161, 1
      %s163 = scalar_select %p160, %s161, %s162
      %p166 = pneg %p160
      %p167 = scmp.eq.s32.totalorder %s14, 1
      %p168 = por %p166, %p167
      %p169 = scmp.ne.s32.totalorder %s161, %s164
      %p170 = scmp.eq.s32.totalorder %s14, 0
      %p171 = por %p169, %p170
      %p172 = scmp.ne.s32.totalorder %s161, %s164
      %p173 = scmp.eq.s32.totalorder %s19, 1
      %p174 = por %p172, %p173
      %p175 = scmp.ne.s32.totalorder %s164, %s165
      %p176 = scmp.eq.s32.totalorder %s19, 0
      %p177 = por %p175, %p176
      %p178 = scmp.ne.s32.totalorder %s164, %s165
      %p179 = scmp.eq.s32.totalorder %s20, 1
      %p180 = por %p178, %p179
      %p182 = scmp.ne.s32.totalorder %s165, %s181
      %p183 = scmp.eq.s32.totalorder %s20, 0
      %p184 = por %p182, %p183
      %p185 = scmp.le.s32.totalorder 1, %s14
      %p186 = scmp.lt.s32.totalorder %s14, 3
      %p187 = pnand %p185, %p186
      %p188 = pneg %p187
      // Predicated region
      $region9: #{tpu_custom_call.1} parent=5 // pred_check
        _
      $region10: #{tpu_custom_call.1} parent=5 // pred_check_branch
        %190 = sbr.rel (%p187) target = $region12
      $region11: #{tpu_custom_call.1} parent=5 // pred_region
        %s191 = ssub.s32 %s14, 1
        // Predicated region
        $region13: #{tpu_custom_call.1} parent=11 // pred_check
          %p192 = pneg %p78
        $region14: #{tpu_custom_call.1} parent=11 // pred_check_branch
          %194 = sbr.rel (%p192) target = $region16
        $region15: #{tpu_custom_call.1} parent=11 // pred_region
          %p195 = scmp.lt.s32.totalorder %s24, 0
          %s196 = scalar_select %p195, %s24, 0
          %s197 = smul.addr %s196, 4
          %s198 = scalar_lea.vmem %s1, %s197
        $region16: #{tpu_custom_call.1} parent=11 // pred_fallthru
          _
        // Predicated region
        $region17: #{tpu_custom_call.1} parent=11 // pred_check
          %p199 = pneg %p104
        $region18: #{tpu_custom_call.1} parent=11 // pred_check_branch
          %201 = sbr.rel (%p199) target = $region20
        $region19: #{tpu_custom_call.1} parent=11 // pred_region
          %p202 = scmp.lt.s32.totalorder %s24, 0
          %s203 = scalar_select %p202, %s24, 0
          %s204 = scalar_lea.vmem %s2, %s203
        $region20: #{tpu_custom_call.1} parent=11 // pred_fallthru
          _
        // Predicated region
        $region21: #{tpu_custom_call.1} parent=11 // pred_check
          %p205 = pneg %p130
        $region22: #{tpu_custom_call.1} parent=11 // pred_check_branch
          %207 = sbr.rel (%p205) target = $region24
        $region23: #{tpu_custom_call.1} parent=11 // pred_region
          %s208 = smul.u32 8, %s24
          %p209 = scmp.lt.s32.totalorder %s208, 7
          %s210 = scalar_select %p209, %s208, 7
          %s211 = smul.addr %s210, 4
          %s212 = scalar_lea.vmem %s3, %s211
          %s213 = smul.u32 8, %s24
        $region24: #{tpu_custom_call.1} parent=11 // pred_fallthru
          _
        // Predicated region
        $region25: #{tpu_custom_call.1} parent=11 // pred_check
          %p214 = pneg %p151
        $region26: #{tpu_custom_call.1} parent=11 // pred_check_branch
          %216 = sbr.rel (%p214) target = $region28
        $region27: #{tpu_custom_call.1} parent=11 // pred_region
          _
        $region28: #{tpu_custom_call.1} parent=11 // pred_fallthru
          _
      $region12: #{tpu_custom_call.1} parent=5 // pred_fallthru
        _
      %p217 = scmp.lt.s32.totalorder %s14, 2
      // Predicated region
      $region29: #{tpu_custom_call.1} parent=5 // pred_check
        %p218 = pneg %p217
      $region30: #{tpu_custom_call.1} parent=5 // pred_check_branch
        %220 = sbr.rel (%p218) target = $region32
      $region31: #{tpu_custom_call.1} parent=5 // pred_region
        // Predicated region
        $region33: #{tpu_custom_call.1} parent=31 // pred_check
          %p221 = pneg %p46
        $region34: #{tpu_custom_call.1} parent=31 // pred_check_branch
          %223 = sbr.rel (%p221) target = $region36
        $region35: #{tpu_custom_call.1} parent=31 // pred_region
          %p224 = scmp.lt.s32.totalorder %s21, 1
          %s225 = scalar_select %p224, %s21, 1
          %s226 = smul.addr %s225, 8
          %s227 = scalar_lea.vmem %s0, %s226
        $region36: #{tpu_custom_call.1} parent=31 // pred_fallthru
          _
      $region32: #{tpu_custom_call.1} parent=5 // pred_fallthru
        _
      %p228 = scmp.le.s32.totalorder 1, %s14
      %p229 = scmp.lt.s32.totalorder %s14, 3
      %p230 = pnand %p228, %p229
      %p231 = pneg %p230
      // Predicated region
      $region37: #{tpu_custom_call.1} parent=5 // pred_check
        _
      $region38: #{tpu_custom_call.1} parent=5 // pred_check_branch
        %233 = sbr.rel (%p230) target = $region40
      $region39: #{tpu_custom_call.1} parent=5 // pred_region
        %s234 = ssub.s32 %s14, 1
        %p235 = scmp.lt.s32.totalorder %s23, 1
        %s236 = scalar_select %p235, %s23, 1
        %s237 = smul.addr %s236, 8
        %s238 = scalar_lea.vmem %s0, %s237
        %p239 = pneg %p52
        %p240 = pneg %p49
        %p241 = scmp.lt.s32.totalorder %s24, 0
        %s242 = scalar_select %p241, %s24, 0
        %s243 = smul.addr %s242, 4
        %s244 = scalar_lea.vmem %s1, %s243
        %p245 = pneg %p78
        %p246 = pneg %p75
        %p247 = scmp.lt.s32.totalorder %s24, 0
        %s248 = scalar_select %p247, %s24, 0
        %s249 = scalar_lea.vmem %s2, %s248
        %p250 = pneg %p104
        %p251 = pneg %p101
        %s252 = smul.u32 8, %s24
        %p253 = scmp.lt.s32.totalorder %s252, 7
        %s254 = scalar_select %p253, %s252, 7
        %s255 = smul.addr %s254, 4
        %s256 = scalar_lea.vmem %s3, %s255
        %p257 = pneg %p130
        %p258 = pneg %p127
        %p259 = pneg %p151
        %p260 = pneg %p148
        %p261 = pneg %p177
        %p262 = pneg %p174
        %s263 = sand.u32 %s164, 1
        %s264 = scalar_lea.sflag [#allocation4], %s263
        %s265 = sand.u32 %s164, 1
        %s266 = smul.addr %s265, 8
        %s267 = scalar_lea.vmem [#allocation3], %s266
        %p268 = scmp.lt.s32.totalorder %s23, 1
        %s269 = scalar_select %p268, %s23, 1
        %s270 = smul.addr %s269, 8
        %s271 = scalar_lea.vmem %s0, %s270
        %p272 = scmp.lt.s32.totalorder %s24, 0
        %s273 = scalar_select %p272, %s24, 0
        %s274 = smul.addr %s273, 4
        %s275 = scalar_lea.vmem %s1, %s274
        %p276 = scmp.lt.s32.totalorder %s24, 0
        %s277 = scalar_select %p276, %s24, 0
        %s278 = scalar_lea.vmem %s2, %s277
        %s279 = smul.u32 8, %s24
        %p280 = scmp.lt.s32.totalorder %s279, 7
        %s281 = scalar_select %p280, %s279, 7
        %s282 = smul.addr %s281, 4
        %s283 = scalar_lea.vmem %s3, %s282
        %s284 = smul.u32 8, %s24
        %p286 = scmp.eq.s32.totalorder %s24, 0
        // Predicated region
        $region41: #{tpu_custom_call.1} parent=39 // pred_check
          %p287 = pneg %p286
        $region42: #{tpu_custom_call.1} parent=39 // pred_check_branch
          %289 = sbr.rel (%p287) target = $region44
        $region43: #{tpu_custom_call.1} parent=39 // pred_region
          %vm290 = vcmask 261120
          %291 = vst.msk [vmem:[#allocation2] sm:$0xff] %vm290, 0.0
        $region44: #{tpu_custom_call.1} parent=39 // pred_fallthru
          _
        %v292 = vld [vmem:[%s271] sm:$0xff]
        %v293 = vpack.c.bf16 %v292, %v292
        %v294 = vld [vmem:[%s275] sm:$0xf]
        %v295 = vld [vmem:[%s275 + $0x4] sm:$0xf]
        %v296 = vld [vmem:[%s275 + $0x8] sm:$0xf]
        %v297 = vld [vmem:[%s275 + $0xc] sm:$0xf]
        %v298 = vld [vmem:[%s278] sm:$0x1]
        %v300 = vlaneseq
        %v301 = vshrl.u32 %v300, 7
        %v302 = vsub.s32 0, %v301
        %v303 = vrot.slane %v298, %v302
        %v309 = vunpack.c.l.b16 %v294
        %v310 = vunpack.c.l.b16 %v295
        %v311 = vunpack.c.l.b16 %v296
        %v312 = vunpack.c.l.b16 %v297
        %v313 = vpack.c.b16 %v310, %v309
        %v314 = vpack.c.b16 %v312, %v311
        %vm317 = vcmask 261120
        %v319 = vsel %vm317, %v293, 0
        %321 = vmatprep.subr.bf16.mxu0 0
        %322 = vmatpush1.bf16.msra.mxu0 %v313
        %323 = vmatprep.subr.bf16.mxu0 0
        %324 = vmatpush1.bf16.msra.mxu0 %v314
        %325 = vmatprep.subr.bf16.mxu0 0
        %326 = vmatpush1.bf16.msra.mxu0 0
        %327 = vmatprep.subr.bf16.mxu0 0
        %328 = vmatpush1.bf16.msra.mxu0 0
        %329 = vmatprep.subr.bf16.mxu0 0
        %330 = vmatpush1.bf16.msra.mxu0 0
        %331 = vmatprep.subr.bf16.mxu0 0
        %332 = vmatpush1.bf16.msra.mxu0 0
        %333 = vmatprep.subr.bf16.mxu0 0
        %334 = vmatpush1.bf16.msra.mxu0 0
        %335 = vmatprep.subr.bf16.mxu0 0
        %336 = vmatpush1.bf16.msra.mxu0 0
        %337 = vmatprep.subr.bf16.mxu0 0
        %338 = vmatpush1.bf16.msra.mxu0 0
        %339 = vmatprep.subr.bf16.mxu0 0
        %340 = vmatpush1.bf16.msra.mxu0 0
        %341 = vmatprep.subr.bf16.mxu0 0
        %342 = vmatpush1.bf16.msra.mxu0 0
        %343 = vmatprep.subr.bf16.mxu0 0
        %344 = vmatpush1.bf16.msra.mxu0 0
        %345 = vmatprep.subr.bf16.mxu0 0
        %346 = vmatpush1.bf16.msra.mxu0 0
        %347 = vmatprep.subr.bf16.mxu0 0
        %348 = vmatpush1.bf16.msra.mxu0 0
        %349 = vmatprep.subr.bf16.mxu0 0
        %350 = vmatpush1.bf16.msra.mxu0 0
        %351 = vmatprep.subr.bf16.mxu0 0
        %352 = vmatpush1.bf16.msra.mxu0 0
        %353 = vmatprep.mubr.bf16.mxu0 0
        %354 = vmatmul.mubr.bf16.gmra.mrb[0].mxu0 %v319
        %v355 = vpop.f32.mrb[0].mxu0
        %v356 = vadd.f32 %v303, %v355
        %v357 = vpop.f32.mrb[0].mxu0
        %v358 = vpop.f32.mrb[0].mxu0
        %v359 = vpop.f32.mrb[0].mxu0
        %360 = vdwg.mxu0
        %v361 = vmul.f32 %v356, 0.5
        %v362 = vmul.f32 %v356, 0.70710677
        %v363 = verf.f32.pop %v362
        %v364 = vadd.f32 %v363, 1.0
        %v365 = vmul.f32 %v361, %v364
        %v366 = vld [vmem:[#allocation2] sm:$0xff]
        %v367 = vpack.c.bf16 %v365, %v365
        %v368 = vld [vmem:[%s283] sm:$0xf]
        %v369 = vld [vmem:[%s283 + $0x4] sm:$0xf]
        %v370 = vld [vmem:[%s283 + $0x8] sm:$0xf]
        %v371 = vld [vmem:[%s283 + $0xc] sm:$0xf]
        %v372 = vld [vmem:[%s283 + $0x10] sm:$0xf]
        %v373 = vld [vmem:[%s283 + $0x14] sm:$0xf]
        %v374 = vld [vmem:[%s283 + $0x18] sm:$0xf]
        %v375 = vld [vmem:[%s283 + $0x1c] sm:$0xf]
        %v384 = vunpack.c.l.b16 %v368
        %v385 = vunpack.c.l.b16 %v369
        %v386 = vunpack.c.l.b16 %v370
        %v387 = vunpack.c.l.b16 %v371
        %v388 = vunpack.c.l.b16 %v372
        %v389 = vunpack.c.l.b16 %v373
        %v390 = vunpack.c.l.b16 %v374
        %v391 = vunpack.c.l.b16 %v375
        %v392 = vpack.c.b16 %v385, %v384
        %v393 = vpack.c.b16 %v387, %v386
        %v394 = vpack.c.b16 %v389, %v388
        %v395 = vpack.c.b16 %v391, %v390
        %vm400 = vcmask 523264
        %v402 = vsel %vm400, %v367, 0
        %404 = vmatprep.subr.bf16.mxu0 0
        %405 = vmatpush1.bf16.msra.mxu0 %v392
        %406 = vmatprep.subr.bf16.mxu0 0
        %407 = vmatpush1.bf16.msra.mxu0 %v393
        %408 = vmatprep.subr.bf16.mxu0 0
        %409 = vmatpush1.bf16.msra.mxu0 %v394
        %410 = vmatprep.subr.bf16.mxu0 0
        %411 = vmatpush1.bf16.msra.mxu0 %v395
        %412 = vmatprep.subr.bf16.mxu0 0
        %413 = vmatpush1.bf16.msra.mxu0 0
        %414 = vmatprep.subr.bf16.mxu0 0
        %415 = vmatpush1.bf16.msra.mxu0 0
        %416 = vmatprep.subr.bf16.mxu0 0
        %417 = vmatpush1.bf16.msra.mxu0 0
        %418 = vmatprep.subr.bf16.mxu0 0
        %419 = vmatpush1.bf16.msra.mxu0 0
        %420 = vmatprep.subr.bf16.mxu0 0
        %421 = vmatpush1.bf16.msra.mxu0 0
        %422 = vmatprep.subr.bf16.mxu0 0
        %423 = vmatpush1.bf16.msra.mxu0 0
        %424 = vmatprep.subr.bf16.mxu0 0
        %425 = vmatpush1.bf16.msra.mxu0 0
        %426 = vmatprep.subr.bf16.mxu0 0
        %427 = vmatpush1.bf16.msra.mxu0 0
        %428 = vmatprep.subr.bf16.mxu0 0
        %429 = vmatpush1.bf16.msra.mxu0 0
        %430 = vmatprep.subr.bf16.mxu0 0
        %431 = vmatpush1.bf16.msra.mxu0 0
        %432 = vmatprep.subr.bf16.mxu0 0
        %433 = vmatpush1.bf16.msra.mxu0 0
        %434 = vmatprep.subr.bf16.mxu0 0
        %435 = vmatpush1.bf16.msra.mxu0 0
        %436 = vmatprep.mubr.bf16.mxu0 0
        %437 = vmatmul.mubr.bf16.gmra.mrb[0].mxu0 %v402
        %v438 = vpop.f32.mrb[0].mxu0
        %v439 = vadd.f32 0.0, %v438
        %v440 = vpop.f32.mrb[0].mxu0
        %v441 = vpop.f32.mrb[0].mxu0
        %v442 = vpop.f32.mrb[0].mxu0
        %443 = vdwg.mxu0
        %v444 = vadd.f32 %v366, %v439
        %445 = vst.msk [vmem:[#allocation2] sm:$0xff] %vm317, %v444
        // Predicated region
        $region45: #{tpu_custom_call.1} parent=39 // pred_check
          %p446 = pneg %p286
        $region46: #{tpu_custom_call.1} parent=39 // pred_check_branch
          %448 = sbr.rel (%p446) target = $region48
        $region47: #{tpu_custom_call.1} parent=39 // pred_region
          %v449 = vld [vmem:[#allocation2] sm:$0xff]
          %v450 = vld [vmem:[%s4] sm:$0x1]
          %v452 = vlaneseq
          %v453 = vshrl.u32 %v452, 7
          %v454 = vsub.s32 0, %v453
          %v455 = vrot.slane %v450, %v454
          %v457 = vadd.f32 %v449, %v455
          %458 = vst.msk [vmem:[%s267] sm:$0xff] %vm317, %v457
        $region48: #{tpu_custom_call.1} parent=39 // pred_fallthru
          _
        %s459 = sand.u32 %s164, 1
        %s460 = scalar_lea.sflag [#allocation4], %s459
        %s461 = sand.u32 %s164, 1
        %s462 = smul.addr %s461, 8
        %s463 = scalar_lea.vmem [#allocation3], %s462
        // Predicated region
        $region49: #{tpu_custom_call.1} parent=39 // pred_check
          %p464 = pneg %p174
        $region50: #{tpu_custom_call.1} parent=39 // pred_check_branch
          %466 = sbr.rel (%p464) target = $region52
        $region51: #{tpu_custom_call.1} parent=39 // pred_region
          %s468 = ssub.s32 128, 128
          %469 = vsyncadd %s460, %s468
          %s470 = smul.addr %s23, 128
          %s471 = scalar_lea.hbm %s5, %s470
          %s473 = sshll.u32 %s463, 4
          %s474 = int_to_ptr.vmem [resolvable:$true] %s473
          %476 = dma.vmem_to_hbm [thread:$0]  %s474, 128, %s471, %s460
        $region52: #{tpu_custom_call.1} parent=39 // pred_fallthru
          _
      $region40: #{tpu_custom_call.1} parent=5 // pred_fallthru
        _
      %p477 = scmp.le.s32.totalorder 2, %s14
      // Predicated region
      $region53: #{tpu_custom_call.1} parent=5 // pred_check
        %p478 = pneg %p477
      $region54: #{tpu_custom_call.1} parent=5 // pred_check_branch
        %480 = sbr.rel (%p478) target = $region56
      $region55: #{tpu_custom_call.1} parent=5 // pred_region
        %s481 = ssub.s32 %s14, 2
        // Predicated region
        $region57: #{tpu_custom_call.1} parent=55 // pred_check
          %p482 = pneg %p180
        $region58: #{tpu_custom_call.1} parent=55 // pred_check_branch
          %484 = sbr.rel (%p482) target = $region60
        $region59: #{tpu_custom_call.1} parent=55 // pred_region
          %s485 = sand.u32 %s165, 1
          %s486 = scalar_lea.sflag [#allocation4], %s485
          %s487 = sand.u32 %s165, 1
          %s488 = smul.addr %s487, 8
          %s489 = scalar_lea.vmem [#allocation3], %s488
          %490 = dma.done %s486, 128
        $region60: #{tpu_custom_call.1} parent=55 // pred_fallthru
          _
      $region56: #{tpu_custom_call.1} parent=5 // pred_fallthru
        _
    $region6: #{tpu_custom_call.1} parent=1 // loop_footer
      %s18 = sadd.s32 1, %s14
    $region7: #{tpu_custom_call.1} parent=1 // loop_footer_branch
      %13 = sbr.rel target = $region3
    $region8: #{tpu_custom_call.1} parent=1 // loop_exit
      _
    %491 = vsyncpa [#allocation4], 1
    %s492 = scalar_lea.sflag [#allocation4], 1
    %493 = vsyncpa %s492, 1

</llo_original>
